<compile_context>
chip_gen: v5e
topology: v5e:2x2
jax: 0.10.0
libtpu: 0.0.40
codegen_flags: <defaults>
</compile_context>

<pallas_src>
import jax
import jax.numpy as jnp
from jax.experimental import pallas as pl
from jax.experimental.pallas import tpu as pltpu


_TB_CAP = 32768  # lanes per batch tile (~640 KB of bf16 x per grid step)


def _mlp_kernel(xt_ref, w1t_ref, b1_ref, w2_ref, b2_ref, o_ref):
    # Hidden layer on the MXU: (10, 8) bf16 @ (8, TB) bf16 -> (10, TB) f32.
    h = jnp.dot(w1t_ref[...], xt_ref[...], preferred_element_type=jnp.float32)
    h = jnp.maximum(h + b1_ref[...], 0.0)                 # bias + ReLU in f32 (VPU)
    # Output layer as VPU multiply + sublane reduce (skip a tiny 10x1 MXU op).
    z = jnp.sum(h * w2_ref[...], axis=0, keepdims=True) + b2_ref[...]   # (1, TB)
    # Sigmoid via EUP exp + EUP approximate reciprocal; store lane-dense bf16.
    o_ref[...] = pl.reciprocal(1.0 + jnp.exp(-z), approx=True).astype(o_ref.dtype)


def _pick_tile(batch, block_rows=None):
    """Choose (tb, grid, b_pad): tb a multiple of 128, adapted to the batch."""
    n_blk = pl.cdiv(batch, 128)                  # number of 128-lane blocks
    if block_rows is not None:
        # Respect the user hint but force a multiple of 128 (>= 128).
        bpt = max(1, min(block_rows // 128, n_blk))
    else:
        cap_blk = _TB_CAP // 128
        # >= 2 steps so the "parallel" grid axis uses both v7x TensorCores;
        # each step still moves up to ~640 KB of x (HBM-roofline friendly).
        n_steps = max(2, pl.cdiv(n_blk, cap_blk))
        bpt = max(1, min(cap_blk, pl.cdiv(n_blk, n_steps)))
    tb = bpt * 128
    grid = pl.cdiv(n_blk, bpt)
    return tb, grid, grid * tb


def diabetes_mlp(x, w1, b1, w2, b2, *, block_rows=None, feature_major=False):
    """Forward pass.

    x: (B, 8) f32 by default.  If feature_major=True, x must already be the
    kernel-side layout (8, B) bf16 (batch on the lane axis) -- this skips the
    wrapper relayout and its extra HBM round-trip.
    Weights are stored as (in, out): w1 (8,10), b1 (1,10)/(10,), w2 (10,1),
    b2 (1,1)/(1,).  Returns (B, 1) f32.
    """
    if feature_major:
        F, B = x.shape
        xt = x.astype(jnp.bfloat16)
    else:
        B, F = x.shape
        xt = x.astype(jnp.bfloat16).T            # (8, B) bf16, batch on lanes
    H = w1.shape[1]
    assert F == 8 and H == 10 and w2.reshape(-1).shape[0] == 10

    tb, grid_n, b_pad = _pick_tile(B, block_rows)
    if b_pad > B:
        xt = jnp.pad(xt, ((0, 0), (0, b_pad - B)))   # pad in bf16 (cheap)

    # Kernel-side small operands: f32 biases / second-layer weights.
    w1t = w1.astype(jnp.bfloat16).T                # (10, 8)
    b1c = b1.reshape(H, 1).astype(jnp.float32)     # (10, 1)
    w2c = w2.reshape(H, 1).astype(jnp.float32)     # (10, 1)
    b2c = b2.reshape(1, 1).astype(jnp.float32)     # (1, 1)

    flops = 2 * b_pad * (F * H + H)
    bytes_accessed = (b_pad * F * 2 + b_pad * 2          # x in (bf16) + out (bf16)
                      + w1t.size * 2
                      + (b1c.size + w2c.size + b2c.size) * 4)

    out = pl.pallas_call(
        _mlp_kernel,
        out_shape=jax.ShapeDtypeStruct((1, b_pad), jnp.bfloat16),
        grid=(grid_n,),
        in_specs=[
            pl.BlockSpec((F, tb), lambda i: (0, i)),    # x tile, lane-dense
            pl.BlockSpec((H, F), lambda i: (0, 0)),     # VMEM-resident weights
            pl.BlockSpec((H, 1), lambda i: (0, 0)),
            pl.BlockSpec((H, 1), lambda i: (0, 0)),
            pl.BlockSpec((1, 1), lambda i: (0, 0)),
        ],
        out_specs=pl.BlockSpec((1, tb), lambda i: (0, i)),   # lane-dense store
        compiler_params=pltpu.CompilerParams(
            dimension_semantics=("parallel",),
        ),
        cost_estimate=pl.CostEstimate(
            flops=flops, transcendentals=b_pad, bytes_accessed=bytes_accessed),
    )(xt, w1t, b1c, w2c, b2c)

    return out[0, :B].astype(jnp.float32).reshape(B, 1)


def init_params(key):
    """Deterministic init matching nn.Linear shapes (stored as (in, out))."""
    k1, k2, k3, k4 = jax.random.split(key, 4)
    lim1 = 1.0 / jnp.sqrt(8.0)
    lim2 = 1.0 / jnp.sqrt(10.0)
    w1 = jax.random.uniform(k1, (8, 10), jnp.float32, -lim1, lim1)
    b1 = jax.random.uniform(k2, (1, 10), jnp.float32, -lim1, lim1)
    w2 = jax.random.uniform(k3, (10, 1), jnp.float32, -lim2, lim2)
    b2 = jax.random.uniform(k4, (1, 1), jnp.float32, -lim2, lim2)
    return w1, b1, w2, b2


if __name__ == "__main__":
    key = jax.random.PRNGKey(0)
    kx, kp = jax.random.split(key)
    w1, b1, w2, b2 = init_params(kp)

    def ref_fwd(x):
        return jax.nn.sigmoid(jnp.maximum(x @ w1 + b1, 0.0) @ w2 + b2)

    # Case 1: small batch with explicit block_rows=128 -> multi-step grid (3,)
    # and padding 300 -> 384.
    B1 = 300
    x1 = jax.random.normal(kx, (B1, 8), jnp.float32)
    out1 = diabetes_mlp(x1, w1, b1, w2, b2, block_rows=128)
    jax.block_until_ready(out1)
    assert out1.shape == (B1, 1)
    assert jnp.allclose(out1, ref_fwd(x1), atol=1e-2), "mismatch vs reference (case 1)"

    # Case 2: auto tile selection (batch-adaptive tb, >= 2 grid steps).
    B2 = 1024
    x2 = jax.random.normal(jax.random.PRNGKey(1), (B2, 8), jnp.float32)
    out2 = diabetes_mlp(x2, w1, b1, w2, b2)
    jax.block_until_ready(out2)
    assert out2.shape == (B2, 1)
    assert jnp.allclose(out2, ref_fwd(x2), atol=1e-2), "mismatch vs reference (case 2)"

    print("KERNEL_OK")
</pallas_src>

<mosaic_0001>
module attributes {stable_mosaic.version = 11 : i64} {
  func.func @_mlp_kernel(%arg0: i32, %arg1: memref<8x128xbf16, #tpu.memory_space<vmem>>, %arg2: memref<10x8xbf16, #tpu.memory_space<vmem>>, %arg3: memref<10x1xf32, #tpu.memory_space<vmem>>, %arg4: memref<10x1xf32, #tpu.memory_space<vmem>>, %arg5: memref<1x1xf32, #tpu.memory_space<vmem>>, %arg6: memref<1x128xbf16, #tpu.memory_space<vmem>>) attributes {dimension_semantics = [#tpu.dimension_semantics<parallel>], iteration_bounds = array<i64: 3>, scalar_prefetch = 0 : i64, scratch_operands = 0 : i64, tpu.core_type = #tpu.core_type<tc>, window_params = [{transform_indices = @transform_0, window_bounds = array<i64: 8, 128>}, {pipeline_mode = #tpu.pipeline_mode<synchronous>, transform_indices = @transform_1, window_bounds = array<i64: 10, 8>}, {pipeline_mode = #tpu.pipeline_mode<synchronous>, transform_indices = @transform_2, window_bounds = array<i64: 10, 1>}, {pipeline_mode = #tpu.pipeline_mode<synchronous>, transform_indices = @transform_3, window_bounds = array<i64: 10, 1>}, {pipeline_mode = #tpu.pipeline_mode<synchronous>, transform_indices = @transform_4, window_bounds = array<i64: 1, 1>}, {transform_indices = @transform_5, window_bounds = array<i64: 1, 128>}]} {
    %c0 = arith.constant 0 : index
    %c0_0 = arith.constant 0 : index
    %0 = vector.load %arg2[%c0, %c0_0] : memref<10x8xbf16, #tpu.memory_space<vmem>>, vector<10x8xbf16>
    %c0_1 = arith.constant 0 : index
    %c0_2 = arith.constant 0 : index
    %1 = vector.load %arg1[%c0_1, %c0_2] : memref<8x128xbf16, #tpu.memory_space<vmem>>, vector<8x128xbf16>
    %cst = arith.constant dense<0.000000e+00> : vector<10x128xf32>
    %2 = tpu.matmul %0, %1, %cst {dimension_numbers = #tpu.dot_dimension_numbers<[1], [0], [0], [1], [0, 0, 1, 1], [], []>} : vector<10x8xbf16>, vector<8x128xbf16>, vector<10x128xf32> -> vector<10x128xf32>
    %c0_3 = arith.constant 0 : index
    %c0_4 = arith.constant 0 : index
    %3 = vector.load %arg3[%c0_3, %c0_4] : memref<10x1xf32, #tpu.memory_space<vmem>>, vector<10x1xf32>
    %4 = vector.broadcast %3 : vector<10x1xf32> to vector<10x128xf32>
    %5 = arith.addf %2, %4 : vector<10x128xf32>
    %cst_5 = arith.constant 0.000000e+00 : f32
    %6 = vector.broadcast %cst_5 : f32 to vector<10x128xf32>
    %7 = arith.maximumf %5, %6 : vector<10x128xf32>
    %c0_6 = arith.constant 0 : index
    %c0_7 = arith.constant 0 : index
    %8 = vector.load %arg4[%c0_6, %c0_7] : memref<10x1xf32, #tpu.memory_space<vmem>>, vector<10x1xf32>
    %9 = vector.broadcast %8 : vector<10x1xf32> to vector<10x128xf32>
    %10 = arith.mulf %7, %9 : vector<10x128xf32>
    %cst_8 = arith.constant dense<0.000000e+00> : vector<128xf32>
    %11 = vector.multi_reduction <add>, %10, %cst_8 [0] : vector<10x128xf32> to vector<128xf32>
    %12 = vector.shape_cast %11 : vector<128xf32> to vector<1x128xf32>
    %c0_9 = arith.constant 0 : index
    %c0_10 = arith.constant 0 : index
    %13 = vector.load %arg5[%c0_9, %c0_10] : memref<1x1xf32, #tpu.memory_space<vmem>>, vector<1x1xf32>
    %14 = vector.broadcast %13 : vector<1x1xf32> to vector<1x128xf32>
    %15 = arith.addf %12, %14 : vector<1x128xf32>
    %cst_11 = arith.constant 0.000000e+00 : f32
    %16 = vector.broadcast %cst_11 : f32 to vector<1x128xf32>
    %17 = arith.subf %16, %15 : vector<1x128xf32>
    %18 = math.exp %17 : vector<1x128xf32>
    %cst_12 = arith.constant 1.000000e+00 : f32
    %19 = vector.broadcast %cst_12 : f32 to vector<1x128xf32>
    %20 = arith.addf %19, %18 : vector<1x128xf32>
    %21 = tpu.reciprocal %20 {approx = true} : vector<1x128xf32> -> vector<1x128xf32>
    %22 = arith.truncf %21 : vector<1x128xf32> to vector<1x128xbf16>
    %c0_13 = arith.constant 0 : index
    %c0_14 = arith.constant 0 : index
    %23 = vector.load %arg6[%c0_13, %c0_14] : memref<1x128xbf16, #tpu.memory_space<vmem>>, vector<1x128xbf16>
    tpu.vector_store %arg6[%c0_13, %c0_14], %22 {strides = array<i32>} : memref<1x128xbf16, #tpu.memory_space<vmem>>, vector<1x128xbf16>,
    return
  }
  func.func @transform_0(%arg0: i32) -> (i32, i32) {
    %c0_i32 = arith.constant 0 : i32
    %c0_i32_0 = arith.constant 0 : i32
    return %c0_i32, %arg0 : i32, i32
  }
  func.func @transform_1(%arg0: i32) -> (i32, i32) {
    %c0_i32 = arith.constant 0 : i32
    %c0_i32_0 = arith.constant 0 : i32
    %c0_i32_1 = arith.constant 0 : i32
    return %c0_i32, %c0_i32_0 : i32, i32
  }
  func.func @transform_2(%arg0: i32) -> (i32, i32) {
    %c0_i32 = arith.constant 0 : i32
    %c0_i32_0 = arith.constant 0 : i32
    %c0_i32_1 = arith.constant 0 : i32
    return %c0_i32, %c0_i32_0 : i32, i32
  }
  func.func @transform_3(%arg0: i32) -> (i32, i32) {
    %c0_i32 = arith.constant 0 : i32
    %c0_i32_0 = arith.constant 0 : i32
    %c0_i32_1 = arith.constant 0 : i32
    return %c0_i32, %c0_i32_0 : i32, i32
  }
  func.func @transform_4(%arg0: i32) -> (i32, i32) {
    %c0_i32 = arith.constant 0 : i32
    %c0_i32_0 = arith.constant 0 : i32
    %c0_i32_1 = arith.constant 0 : i32
    return %c0_i32, %c0_i32_0 : i32, i32
  }
  func.func @transform_5(%arg0: i32) -> (i32, i32) {
    %c0_i32 = arith.constant 0 : i32
    %c0_i32_0 = arith.constant 0 : i32
    return %c0_i32, %arg0 : i32, i32
  }
}

</mosaic_0001>

<llo_original>
// kernel: tpu_custom_call.1
$region0: #{tpu_custom_call.1}
  #allocation0 [shape = 'u32[]', space=smem, size = 0x4, offset = 0x4, fixed_abs, tag = 'smem constant byte address 0x4 - core index']
  #allocation1 [shape = 'u32[72,128]{1,0:T(1,128)}', space=vmem, size = 0x9000, scoped, tag = 'internal scratch']
  #allocation2 [shape = 'f32[1,1]{1,0:T(1,128)S(1)}', space=vmem, size = 0x200, scoped, tag = 'scoped memory for tpu_custom_call.1']
  %s0 = inlined_call_operand.vmem [shape: bf16[8,384], index: 0, kind: input, shape index: {}]
  %s1 = inlined_call_operand.vmem [shape: bf16[10,8], index: 1, kind: input, shape index: {}]
  %s2 = inlined_call_operand.vmem [shape: f32[10,1], index: 2, kind: input, shape index: {}]
  %s3 = inlined_call_operand.vmem [shape: f32[10,1], index: 3, kind: input, shape index: {}]
  %s4 = inlined_call_operand.<no memory space> [shape: f32[1,1], index: 4, kind: input, shape index: {}]
  %s5 = inlined_call_operand.hbm [shape: bf16[1,384], index: 5, kind: output, shape index: {}]
  %s6 = sld [smem:[#allocation0]]
  $region53: #{tpu_custom_call.1} parent=0
    _
  %s8 = ssub.s32 1, %s6
  %s9 = scalar_select 0, %s8, %s6
  %v10 = vstv %s4
  %11 = vst [vmem:[#allocation2] sm:$0x1] %v10
  $region1: #{tpu_custom_call.1} parent=0
    #allocation3 [shape = 'u8[1024]{0}', space=vmem, size = 0x400, scoped, tag = 'output window, operand 0']
    #allocation4 [shape = 's32[2]{0}', space=sflag, size = 0x8, scoped, tag = 'scoped memory for tpu_custom_call.1']
    %12 = vsyncpa [#allocation4], 0
    %s13 = scalar_lea.sflag [#allocation4], 1
    %14 = vsyncpa %s13, 0
    loop: start=0, step=1, limit=5
    $region2: #{tpu_custom_call.1} parent=1 // loop_pre_header
      _
    $region3: #{tpu_custom_call.1} parent=1 // loop_header
      %s16 = sphi 0, %s20
      %p17 = scmp.ge.s32.totalorder %s16, 5
      %s26 = sphi 0, %s28
      %s29 = sphi 0, %s26
      %s30 = sphi 0, %s29
      %s46 = sphi 0, %s30
      %s50 = sphi 0, %s50
      %s52 = sphi 0, %s50
      %s53 = sphi 0, %s52
      %s67 = sphi 0, %s53
      %s71 = sphi 0, %s71
      %s73 = sphi 0, %s71
      %s74 = sphi 0, %s73
      %s88 = sphi 0, %s74
      %s92 = sphi 0, %s92
      %s94 = sphi 0, %s92
      %s95 = sphi 0, %s94
      %s109 = sphi 0, %s95
      %s113 = sphi 0, %s113
      %s115 = sphi 0, %s113
      %s116 = sphi 0, %s115
      %s130 = sphi 0, %s116
      %s136 = sphi 0, %s138
      %s139 = sphi 0, %s136
      %s140 = sphi 0, %s139
      %s156 = sphi 0, %s140
    $region4: #{tpu_custom_call.1} parent=1 // loop_header_branch
      %19 = sbr.rel (%p17) target = $region8
    $region5: #{tpu_custom_call.1} parent=1 // loop_body
      %s21 = ssub.s32 %s16, 1
      %s22 = ssub.s32 %s16, 2
      %s23 = sadd.s32 %s16, 1
      %s24 = ssub.s32 %s16, %s23
      %p25 = scmp.eq.s32.totalorder %s24, 0
      %s27 = sadd.s32 %s26, 1
      %s28 = scalar_select %p25, %s26, %s27
      %p31 = pneg %p25
      %p32 = scmp.eq.s32.totalorder %s16, 2
      %p33 = por %p31, %p32
      %p34 = scmp.ne.s32.totalorder %s26, %s29
      %p35 = scmp.eq.s32.totalorder %s16, 0
      %p36 = por %p34, %p35
      %p37 = scmp.ne.s32.totalorder %s26, %s29
      %p38 = scmp.eq.s32.totalorder %s21, 2
      %p39 = por %p37, %p38
      %p40 = scmp.ne.s32.totalorder %s29, %s30
      %p41 = scmp.eq.s32.totalorder %s21, 0
      %p42 = por %p40, %p41
      %p43 = scmp.ne.s32.totalorder %s29, %s30
      %p44 = scmp.eq.s32.totalorder %s22, 2
      %p45 = por %p43, %p44
      %p47 = scmp.ne.s32.totalorder %s30, %s46
      %p48 = scmp.eq.s32.totalorder %s22, 0
      %p49 = por %p47, %p48
      %s51 = sadd.s32 %s50, 1
      %p54 = scmp.eq.s32.totalorder %s16, 2
      %p55 = scmp.ne.s32.totalorder %s50, %s52
      %p56 = scmp.eq.s32.totalorder %s16, 0
      %p57 = por %p55, %p56
      %p58 = scmp.ne.s32.totalorder %s50, %s52
      %p59 = scmp.eq.s32.totalorder %s21, 2
      %p60 = por %p58, %p59
      %p61 = scmp.ne.s32.totalorder %s52, %s53
      %p62 = scmp.eq.s32.totalorder %s21, 0
      %p63 = por %p61, %p62
      %p64 = scmp.ne.s32.totalorder %s52, %s53
      %p65 = scmp.eq.s32.totalorder %s22, 2
      %p66 = por %p64, %p65
      %p68 = scmp.ne.s32.totalorder %s53, %s67
      %p69 = scmp.eq.s32.totalorder %s22, 0
      %p70 = por %p68, %p69
      %s72 = sadd.s32 %s71, 1
      %p75 = scmp.eq.s32.totalorder %s16, 2
      %p76 = scmp.ne.s32.totalorder %s71, %s73
      %p77 = scmp.eq.s32.totalorder %s16, 0
      %p78 = por %p76, %p77
      %p79 = scmp.ne.s32.totalorder %s71, %s73
      %p80 = scmp.eq.s32.totalorder %s21, 2
      %p81 = por %p79, %p80
      %p82 = scmp.ne.s32.totalorder %s73, %s74
      %p83 = scmp.eq.s32.totalorder %s21, 0
      %p84 = por %p82, %p83
      %p85 = scmp.ne.s32.totalorder %s73, %s74
      %p86 = scmp.eq.s32.totalorder %s22, 2
      %p87 = por %p85, %p86
      %p89 = scmp.ne.s32.totalorder %s74, %s88
      %p90 = scmp.eq.s32.totalorder %s22, 0
      %p91 = por %p89, %p90
      %s93 = sadd.s32 %s92, 1
      %p96 = scmp.eq.s32.totalorder %s16, 2
      %p97 = scmp.ne.s32.totalorder %s92, %s94
      %p98 = scmp.eq.s32.totalorder %s16, 0
      %p99 = por %p97, %p98
      %p100 = scmp.ne.s32.totalorder %s92, %s94
      %p101 = scmp.eq.s32.totalorder %s21, 2
      %p102 = por %p100, %p101
      %p103 = scmp.ne.s32.totalorder %s94, %s95
      %p104 = scmp.eq.s32.totalorder %s21, 0
      %p105 = por %p103, %p104
      %p106 = scmp.ne.s32.totalorder %s94, %s95
      %p107 = scmp.eq.s32.totalorder %s22, 2
      %p108 = por %p106, %p107
      %p110 = scmp.ne.s32.totalorder %s95, %s109
      %p111 = scmp.eq.s32.totalorder %s22, 0
      %p112 = por %p110, %p111
      %s114 = sadd.s32 %s113, 1
      %p117 = scmp.eq.s32.totalorder %s16, 2
      %p118 = scmp.ne.s32.totalorder %s113, %s115
      %p119 = scmp.eq.s32.totalorder %s16, 0
      %p120 = por %p118, %p119
      %p121 = scmp.ne.s32.totalorder %s113, %s115
      %p122 = scmp.eq.s32.totalorder %s21, 2
      %p123 = por %p121, %p122
      %p124 = scmp.ne.s32.totalorder %s115, %s116
      %p125 = scmp.eq.s32.totalorder %s21, 0
      %p126 = por %p124, %p125
      %p127 = scmp.ne.s32.totalorder %s115, %s116
      %p128 = scmp.eq.s32.totalorder %s22, 2
      %p129 = por %p127, %p128
      %p131 = scmp.ne.s32.totalorder %s116, %s130
      %p132 = scmp.eq.s32.totalorder %s22, 0
      %p133 = por %p131, %p132
      %s134 = ssub.s32 %s16, %s23
      %p135 = scmp.eq.s32.totalorder %s134, 0
      %s137 = sadd.s32 %s136, 1
      %s138 = scalar_select %p135, %s136, %s137
      %p141 = pneg %p135
      %p142 = scmp.eq.s32.totalorder %s16, 2
      %p143 = por %p141, %p142
      %p144 = scmp.ne.s32.totalorder %s136, %s139
      %p145 = scmp.eq.s32.totalorder %s16, 0
      %p146 = por %p144, %p145
      %p147 = scmp.ne.s32.totalorder %s136, %s139
      %p148 = scmp.eq.s32.totalorder %s21, 2
      %p149 = por %p147, %p148
      %p150 = scmp.ne.s32.totalorder %s139, %s140
      %p151 = scmp.eq.s32.totalorder %s21, 0
      %p152 = por %p150, %p151
      %p153 = scmp.ne.s32.totalorder %s139, %s140
      %p154 = scmp.eq.s32.totalorder %s22, 2
      %p155 = por %p153, %p154
      %p157 = scmp.ne.s32.totalorder %s140, %s156
      %p158 = scmp.eq.s32.totalorder %s22, 0
      %p159 = por %p157, %p158
      %p160 = scmp.le.s32.totalorder 1, %s16
      %p161 = scmp.lt.s32.totalorder %s16, 4
      %p162 = pnand %p160, %p161
      %p163 = pneg %p162
      // Predicated region
      $region9: #{tpu_custom_call.1} parent=5 // pred_check
        _
      $region10: #{tpu_custom_call.1} parent=5 // pred_check_branch
        %165 = sbr.rel (%p162) target = $region12
      $region11: #{tpu_custom_call.1} parent=5 // pred_region
        %s166 = ssub.s32 %s16, 1
        // Predicated region
        $region13: #{tpu_custom_call.1} parent=11 // pred_check
          %p167 = pneg %p63
        $region14: #{tpu_custom_call.1} parent=11 // pred_check_branch
          %169 = sbr.rel (%p167) target = $region16
        $region15: #{tpu_custom_call.1} parent=11 // pred_region
          _
        $region16: #{tpu_custom_call.1} parent=11 // pred_fallthru
          _
        // Predicated region
        $region17: #{tpu_custom_call.1} parent=11 // pred_check
          %p170 = pneg %p84
        $region18: #{tpu_custom_call.1} parent=11 // pred_check_branch
          %172 = sbr.rel (%p170) target = $region20
        $region19: #{tpu_custom_call.1} parent=11 // pred_region
          _
        $region20: #{tpu_custom_call.1} parent=11 // pred_fallthru
          _
        // Predicated region
        $region21: #{tpu_custom_call.1} parent=11 // pred_check
          %p173 = pneg %p105
        $region22: #{tpu_custom_call.1} parent=11 // pred_check_branch
          %175 = sbr.rel (%p173) target = $region24
        $region23: #{tpu_custom_call.1} parent=11 // pred_region
          _
        $region24: #{tpu_custom_call.1} parent=11 // pred_fallthru
          _
        // Predicated region
        $region25: #{tpu_custom_call.1} parent=11 // pred_check
          %p176 = pneg %p126
        $region26: #{tpu_custom_call.1} parent=11 // pred_check_branch
          %178 = sbr.rel (%p176) target = $region28
        $region27: #{tpu_custom_call.1} parent=11 // pred_region
          _
        $region28: #{tpu_custom_call.1} parent=11 // pred_fallthru
          _
      $region12: #{tpu_custom_call.1} parent=5 // pred_fallthru
        _
      %p179 = scmp.lt.s32.totalorder %s16, 3
      // Predicated region
      $region29: #{tpu_custom_call.1} parent=5 // pred_check
        %p180 = pneg %p179
      $region30: #{tpu_custom_call.1} parent=5 // pred_check_branch
        %182 = sbr.rel (%p180) target = $region32
      $region31: #{tpu_custom_call.1} parent=5 // pred_region
        // Predicated region
        $region33: #{tpu_custom_call.1} parent=31 // pred_check
          %p183 = pneg %p36
        $region34: #{tpu_custom_call.1} parent=31 // pred_check_branch
          %185 = sbr.rel (%p183) target = $region36
        $region35: #{tpu_custom_call.1} parent=31 // pred_region
          %p186 = scmp.lt.s32.totalorder %s16, 2
          %s187 = scalar_select %p186, %s16, 2
          %s188 = smul.addr %s187, 4
          %s189 = scalar_lea.vmem %s0, %s188
        $region36: #{tpu_custom_call.1} parent=31 // pred_fallthru
          _
      $region32: #{tpu_custom_call.1} parent=5 // pred_fallthru
        _
      %p190 = scmp.le.s32.totalorder 1, %s16
      %p191 = scmp.lt.s32.totalorder %s16, 4
      %p192 = pnand %p190, %p191
      %p193 = pneg %p192
      // Predicated region
      $region37: #{tpu_custom_call.1} parent=5 // pred_check
        _
      $region38: #{tpu_custom_call.1} parent=5 // pred_check_branch
        %195 = sbr.rel (%p192) target = $region40
      $region39: #{tpu_custom_call.1} parent=5 // pred_region
        %s196 = ssub.s32 %s16, 1
        %p197 = scmp.lt.s32.totalorder %s21, 2
        %s198 = scalar_select %p197, %s21, 2
        %s199 = smul.addr %s198, 4
        %s200 = scalar_lea.vmem %s0, %s199
        %p201 = pneg %p42
        %p202 = pneg %p39
        %p203 = pneg %p63
        %p204 = pneg %p60
        %p205 = pneg %p84
        %p206 = pneg %p81
        %p207 = pneg %p105
        %p208 = pneg %p102
        %p209 = pneg %p126
        %p210 = pneg %p123
        %p211 = pneg %p152
        %p212 = pneg %p149
        %s213 = sand.u32 %s139, 1
        %s214 = scalar_lea.sflag [#allocation4], %s213
        %s215 = sand.u32 %s139, 1
        %s216 = scalar_lea.vmem [#allocation3], %s215
        %p217 = scmp.lt.s32.totalorder %s21, 2
        %s218 = scalar_select %p217, %s21, 2
        %s219 = smul.addr %s218, 4
        %s220 = scalar_lea.vmem %s0, %s219
        %v222 = vld [vmem:[%s1] sm:$0xf]
        %v223 = vld [vmem:[%s1 + $0x4] sm:$0x1]
        %v224 = vld [vmem:[%s220] sm:$0xf]
        %v225 = vld [vmem:[%s2] sm:$0xff]
        %v226 = vld [vmem:[%s2 + $0x8] sm:$0x3]
        %228 = vset.pattern.permute.xlu0 0
        %229 = vperm.xlu0 %228, %v225
        %v230 = vpop.permute.xlu0 %229
        %233 = vset.pattern.permute.xlu0 0
        %234 = vperm.xlu0 %233, %v226
        %v235 = vpop.permute.xlu0 %234
        %v239 = vunpack.c.l.b16 %v222
        %v240 = vunpack.c.l.b16 %v223
        %v241 = vpack.c.b16 %v240, %v239
        %vm242 = vcmask 64512
        %v244 = vsel %vm242, %v241, 0
        %vm246 = vcmask 1043456
        %v248 = vsel %vm246, %v224, 0
        %250 = vmatpush.bf16.msra.mxu0 0
        %251 = vmatpush.bf16.msra.mxu0 0
        %252 = vmatpush.bf16.msra.mxu0 0
        %253 = vmatpush.bf16.msra.mxu0 0
        %254 = vmatpush.bf16.msra.mxu0 0
        %255 = vmatpush.bf16.msra.mxu0 0
        %256 = vmatpush.bf16.msra.mxu0 0
        %257 = vmatpush.bf16.msra.mxu0 %v248
        %258 = vmatmul.bf16.gmra.mxu0 %v244
        %v259 = vpop.f32.mrf.mxu0
        %v260 = vadd.f32 %v230, %v259
        %v261 = vpop.f32.mrf.mxu0
        %v262 = vadd.f32 %v235, %v261
        %263 = vdwg.mxu0
        %v264 = vmax.f32 %v260, 0.0
        %v265 = vmax.f32 %v262, 0.0
        %v266 = vld [vmem:[%s3] sm:$0xff]
        %v267 = vld [vmem:[%s3 + $0x8] sm:$0x3]
        %269 = vset.pattern.permute.xlu0 0
        %270 = vperm.xlu0 %269, %v266
        %v271 = vpop.permute.xlu0 %270
        %274 = vset.pattern.permute.xlu0 0
        %275 = vperm.xlu0 %274, %v267
        %v276 = vpop.permute.xlu0 %275
        %v278 = vmul.f32 %v264, %v271
        %v279 = vmul.f32 %v265, %v276
        %vm280 = vcmask 1041408
        %v281 = vsel %vm280, %v279, 0.0
        %v282 = vadd.f32 %v278, %v281
        %v283 = vrot.slane %v282, 4
        %v284 = vadd.f32 %v282, %v283
        %v285 = vrot.slane %v284, 2
        %v286 = vadd.f32 %v284, %v285
        %v287 = vrot.slane %v286, 1
        %v288 = vadd.f32 %v286, %v287
        %v289 = vld [vmem:[#allocation2] sm:$0x1]
        %291 = vset.pattern.permute.xlu0 0
        %292 = vperm.xlu0 %291, %v289
        %v293 = vpop.permute.xlu0 %292
        %v295 = vperm.slane %v293, 0
        %v296 = vadd.f32 %v288, %v295
        %v297 = vsub.f32 0.0, %v296
        %v298 = vmul.f32 %v297, 1.442695
        %v299 = vpow.pop %v298
        %v300 = vadd.f32 %v299, 1.0
        %v301 = vrcp.pop %v300
        %v302 = vpack.c.bf16 %v301, %v301
        %vm303 = vcmask 1040384
        %vm304 = vsmask.f32 256
        %vm305 = vmand %vm303, %vm304
        %v306 = vld [vmem:[%s216] sm:$0x1]
        %v307 = vsel %vm305, %v302, %v306
        %308 = vst [vmem:[%s216] sm:$0x1] %v307
        %s309 = sand.u32 %s139, 1
        %s310 = scalar_lea.sflag [#allocation4], %s309
        %s311 = sand.u32 %s139, 1
        %s312 = scalar_lea.vmem [#allocation3], %s311
        // Predicated region
        $region41: #{tpu_custom_call.1} parent=39 // pred_check
          %p313 = pneg %p149
        $region42: #{tpu_custom_call.1} parent=39 // pred_check_branch
          %315 = sbr.rel (%p313) target = $region44
        $region43: #{tpu_custom_call.1} parent=39 // pred_region
          %317 = vsyncadd %s310, 0
          %s318 = scalar_lea.hbm %s5, %s21
          %s320 = sshll.u32 %s312, 4
          %s321 = int_to_ptr.vmem [resolvable:$true] %s320
          %s322 = sshll.u32 %s318, 4
          %s323 = int_to_ptr.hbm [resolvable:$true] %s322
          %325 = dma.vmem_to_hbm [thread:$0]  %s321, 16, %s323, %s310
        $region44: #{tpu_custom_call.1} parent=39 // pred_fallthru
          _
      $region40: #{tpu_custom_call.1} parent=5 // pred_fallthru
        _
      %p326 = scmp.le.s32.totalorder 2, %s16
      // Predicated region
      $region45: #{tpu_custom_call.1} parent=5 // pred_check
        %p327 = pneg %p326
      $region46: #{tpu_custom_call.1} parent=5 // pred_check_branch
        %329 = sbr.rel (%p327) target = $region48
      $region47: #{tpu_custom_call.1} parent=5 // pred_region
        %s330 = ssub.s32 %s16, 2
        // Predicated region
        $region49: #{tpu_custom_call.1} parent=47 // pred_check
          %p331 = pneg %p155
        $region50: #{tpu_custom_call.1} parent=47 // pred_check_branch
          %333 = sbr.rel (%p331) target = $region52
        $region51: #{tpu_custom_call.1} parent=47 // pred_region
          %s334 = sand.u32 %s140, 1
          %s335 = scalar_lea.sflag [#allocation4], %s334
          %s336 = sand.u32 %s140, 1
          %s337 = scalar_lea.vmem [#allocation3], %s336
          %339 = dma.done %s335, 16
        $region52: #{tpu_custom_call.1} parent=47 // pred_fallthru
          _
      $region48: #{tpu_custom_call.1} parent=5 // pred_fallthru
        _
    $region6: #{tpu_custom_call.1} parent=1 // loop_footer
      %s20 = sadd.s32 1, %s16
    $region7: #{tpu_custom_call.1} parent=1 // loop_footer_branch
      %15 = sbr.rel target = $region3
    $region8: #{tpu_custom_call.1} parent=1 // loop_exit
      _
    %340 = vsyncpa [#allocation4], 1
    %s341 = scalar_lea.sflag [#allocation4], 1
    %342 = vsyncpa %s341, 1

</llo_original>
